<compile_context>
chip_gen: v7x
topology: tpu7x:2x2x1
jax: 0.10.0
libtpu: 0.0.40
codegen_flags: <defaults>
</compile_context>

<pallas_src>
import functools
import math

import jax
import jax.numpy as jnp
from jax.experimental import pallas as pl
from jax.experimental.pallas import tpu as pltpu


def _round_up(x: int, m: int) -> int:
    return ((x + m - 1) // m) * m


# -----------------------------------------------------------------------------
# Kernel
# -----------------------------------------------------------------------------
def _make_kernel(spline_order: int):
    d1 = spline_order + 1

    def kernel(
        x_ref,        # VMEM [TB, in]           f32
        base_wt_ref,  # VMEM [in, out]          bf16  (pre-transposed base_weights)
        bern_w_ref,   # VMEM [(d+1)*in, out]    bf16  (pre-reshaped bernstein_coeff)
        ln_g_ref,     # VMEM [1, out]           f32   (LayerNorm gamma)
        ln_b_ref,     # VMEM [1, out]           f32   (LayerNorm beta)
        out_ref,      # VMEM [TB, out]          f32
    ):
        x = x_ref[...]

        # One sigmoid pass (EUP) reused by both the base branch and the
        # Bernstein recurrence input.
        sig = jax.nn.sigmoid(x)

        # --- base branch: F.linear(SiLU(x), base_weights) --------------------
        silu_x = x * sig
        basis = jnp.dot(silu_x.astype(jnp.bfloat16), base_wt_ref[...],
                        preferred_element_type=jnp.float32)            # [TB, out]

        # --- Bernstein polynomial recurrence on xs = sigmoid(x) ---------------
        # Faithful to the torch in-place loop: at level j, slots k and k+1 are
        # read at their level (j-1) values because k increases monotonically.
        xs = sig
        one_minus = 1.0 - xs
        b = [jnp.ones_like(xs) for _ in range(d1)]                      # [TB, in] each
        for j in range(1, spline_order + 1):
            for k in range(d1 - j):
                b[k] = b[k] * one_minus + b[k + 1] * xs

        # --- fused einsum 'bid,iod->bo' as a single matmul --------------------
        # grams[:, d*in + i] = bern[b, i, d];  bern_w[d*in + i, o] = coeff[i, o, d]
        grams = jnp.concatenate(b, axis=-1).astype(jnp.bfloat16)       # [TB, (d+1)*in]
        y = jnp.dot(grams, bern_w_ref[...],
                    preferred_element_type=jnp.float32)                 # [TB, out]

        # --- residual + LayerNorm (eps = 1e-5) + SiLU --------------------------
        z = y + basis
        mean = jnp.mean(z, axis=-1, keepdims=True)
        var = jnp.mean((z - mean) ** 2, axis=-1, keepdims=True)
        zn = (z - mean) * jax.lax.rsqrt(var + 1e-5)
        zn = zn * ln_g_ref[...] + ln_b_ref[...]
        out_ref[...] = zn * jax.nn.sigmoid(zn)

    return kernel


# -----------------------------------------------------------------------------
# One-time parameter layout plumbing (outside the jitted forward path)
# -----------------------------------------------------------------------------
def prepare_params(raw):
    in_f, out_f, d1 = raw["bern_coeff"].shape
    bern_w = jnp.transpose(raw["bern_coeff"], (2, 0, 1)).reshape(d1 * in_f, out_f)
    return {
        "base_wt": jnp.asarray(raw["base_w"].T, jnp.bfloat16),   # [in, out]
        "bern_w": jnp.asarray(bern_w, jnp.bfloat16),             # [(d+1)*in, out]
        "ln_g": raw["ln_g"].reshape(1, -1).astype(jnp.float32),  # [1, out]
        "ln_b": raw["ln_b"].reshape(1, -1).astype(jnp.float32),  # [1, out]
    }


# -----------------------------------------------------------------------------
# Wrapper
# -----------------------------------------------------------------------------
def bernstein_kan_layer(x, kparams, *, spline_order: int, block_b: int = 512):
    """x: [..., in_features] -> [B, out_features] (B = prod of leading dims)."""
    in_f, out_f = kparams["base_wt"].shape
    x = x.reshape(-1, in_f).astype(jnp.float32)
    B = x.shape[0]

    # Batch tile: multiple of 8 sublanes, capped at block_b rows so the
    # double-buffered x/out tiles plus resident weights stay far below scoped
    # VMEM on every generation (v5e 16 MiB ... v7x 32 MiB).
    tb = min(block_b, _round_up(B, 8))
    b_pad = _round_up(B, tb)
    if b_pad != B:
        x = jnp.pad(x, ((0, b_pad - B), (0, 0)))

    kernel = _make_kernel(spline_order)

    out = pl.pallas_call(
        kernel,
        out_shape=jax.ShapeDtypeStruct((b_pad, out_f), jnp.float32),
        grid=(b_pad // tb,),
        in_specs=[
            pl.BlockSpec((tb, in_f), lambda i: (i, 0)),                 # x tile
            pl.BlockSpec(kparams["base_wt"].shape, lambda i: (0, 0)),   # resident
            pl.BlockSpec(kparams["bern_w"].shape, lambda i: (0, 0)),    # resident
            pl.BlockSpec((1, out_f), lambda i: (0, 0)),                 # ln gamma
            pl.BlockSpec((1, out_f), lambda i: (0, 0)),                 # ln beta
        ],
        out_specs=pl.BlockSpec((tb, out_f), lambda i: (i, 0)),
        compiler_params=pltpu.CompilerParams(
            dimension_semantics=("parallel",)),
    )(x, kparams["base_wt"], kparams["bern_w"], kparams["ln_g"], kparams["ln_b"])

    return out[:B]
    # TODO(synk): out_features=32 (<128 lanes) forces masked stores; padding the
    # feature axis to 128 would need a change to the surrounding model contract.


# -----------------------------------------------------------------------------
# Deterministic parameter construction (mirrors module __init__)
# -----------------------------------------------------------------------------
def init_params(key, in_features, out_features, spline_order):
    d1 = spline_order + 1
    k1, k2 = jax.random.split(key)
    bound = math.sqrt(6.0 / (in_features + out_features))      # xavier_uniform
    base_w = jax.random.uniform(k1, (out_features, in_features),
                                jnp.float32, -bound, bound)
    bern_coeff = (jax.random.normal(k2, (in_features, out_features, d1),
                                    jnp.float32)
                  * (1.0 / (in_features * d1)))
    return {
        "base_w": base_w,                                   # [out, in]
        "bern_coeff": bern_coeff,                           # [in, out, d+1]
        "ln_g": jnp.ones((out_features,), jnp.float32),
        "ln_b": jnp.zeros((out_features,), jnp.float32),
    }


# -----------------------------------------------------------------------------
# Pure-JAX f32 reference (faithful to the PyTorch forward)
# -----------------------------------------------------------------------------
def reference(x, raw, spline_order):
    in_f = raw["base_w"].shape[1]
    x = x.reshape(-1, in_f).astype(jnp.float32)
    silu = jax.nn.silu
    basis = silu(x) @ raw["base_w"].T
    xs = jax.nn.sigmoid(x)
    b = [jnp.ones_like(xs) for _ in range(spline_order + 1)]
    for j in range(1, spline_order + 1):
        for k in range(spline_order + 1 - j):
            b[k] = b[k] * (1.0 - xs) + b[k + 1] * xs
    bern = jnp.stack(b, axis=-1)                            # [B, in, d+1]
    y = jnp.einsum("bid,iod->bo", bern, raw["bern_coeff"])
    z = y + basis
    mean = z.mean(-1, keepdims=True)
    var = ((z - mean) ** 2).mean(-1, keepdims=True)
    zn = (z - mean) / jnp.sqrt(var + 1e-5)
    zn = zn * raw["ln_g"] + raw["ln_b"]
    return silu(zn)


# -----------------------------------------------------------------------------
if __name__ == "__main__":
    in_features = 32
    out_features = 32
    spline_order = 3
    batch = 20          # not a multiple of the tile -> exercises pad + multi-step grid

    key = jax.random.PRNGKey(0)
    k_param, k_x = jax.random.split(key)
    raw = init_params(k_param, in_features, out_features, spline_order)
    kparams = prepare_params(raw)
    x = jax.random.normal(k_x, (batch, in_features), jnp.float32)

    fwd = jax.jit(functools.partial(bernstein_kan_layer,
                                    spline_order=spline_order, block_b=8))
    out = jax.block_until_ready(fwd(x, kparams))

    ref = reference(x, raw, spline_order)
    assert out.shape == (batch, out_features)
    max_err = float(jnp.max(jnp.abs(out - ref)))
    assert jnp.allclose(out, ref, rtol=3e-2, atol=3e-2), f"mismatch, max abs err {max_err}"

    print("KERNEL_OK")
</pallas_src>

<mosaic_0001>
module attributes {stable_mosaic.version = 11 : i64} {
  func.func @kernel(%arg0: i32, %arg1: memref<8x32xf32, #tpu.memory_space<vmem>>, %arg2: memref<32x32xbf16, #tpu.memory_space<vmem>>, %arg3: memref<128x32xbf16, #tpu.memory_space<vmem>>, %arg4: memref<1x32xf32, #tpu.memory_space<vmem>>, %arg5: memref<1x32xf32, #tpu.memory_space<vmem>>, %arg6: memref<8x32xf32, #tpu.memory_space<vmem>>) attributes {dimension_semantics = [#tpu.dimension_semantics<parallel>], iteration_bounds = array<i64: 3>, scalar_prefetch = 0 : i64, scratch_operands = 0 : i64, tpu.core_type = #tpu.core_type<tc>, window_params = [{transform_indices = @transform_0, window_bounds = array<i64: 8, 32>}, {pipeline_mode = #tpu.pipeline_mode<synchronous>, transform_indices = @transform_1, window_bounds = array<i64: 32, 32>}, {pipeline_mode = #tpu.pipeline_mode<synchronous>, transform_indices = @transform_2, window_bounds = array<i64: 128, 32>}, {pipeline_mode = #tpu.pipeline_mode<synchronous>, transform_indices = @transform_3, window_bounds = array<i64: 1, 32>}, {pipeline_mode = #tpu.pipeline_mode<synchronous>, transform_indices = @transform_4, window_bounds = array<i64: 1, 32>}, {transform_indices = @transform_5, window_bounds = array<i64: 8, 32>}]} {
    %c0 = arith.constant 0 : index
    %c0_0 = arith.constant 0 : index
    %0 = vector.load %arg1[%c0, %c0_0] : memref<8x32xf32, #tpu.memory_space<vmem>>, vector<8x32xf32>
    %1 = arith.negf %0 : vector<8x32xf32>
    %2 = math.exp %1 : vector<8x32xf32>
    %cst = arith.constant 1.000000e+00 : f32
    %3 = vector.broadcast %cst : f32 to vector<8x32xf32>
    %4 = arith.addf %3, %2 : vector<8x32xf32>
    %5 = arith.divf %3, %4 : vector<8x32xf32>
    %6 = arith.mulf %0, %5 : vector<8x32xf32>
    %7 = arith.truncf %6 : vector<8x32xf32> to vector<8x32xbf16>
    %c0_1 = arith.constant 0 : index
    %c0_2 = arith.constant 0 : index
    %8 = vector.load %arg2[%c0_1, %c0_2] : memref<32x32xbf16, #tpu.memory_space<vmem>>, vector<32x32xbf16>
    %cst_3 = arith.constant dense<0.000000e+00> : vector<8x32xf32>
    %9 = tpu.matmul %7, %8, %cst_3 {dimension_numbers = #tpu.dot_dimension_numbers<[1], [0], [0], [1], [0, 0, 1, 1], [], []>} : vector<8x32xbf16>, vector<32x32xbf16>, vector<8x32xf32> -> vector<8x32xf32>
    %cst_4 = arith.constant 1.000000e+00 : f32
    %10 = vector.broadcast %cst_4 : f32 to vector<8x32xf32>
    %11 = arith.subf %10, %5 : vector<8x32xf32>
    %cst_5 = arith.constant 1.000000e+00 : f32
    %12 = vector.broadcast %cst_5 : f32 to vector<8x32xf32>
    %cst_6 = arith.constant 1.000000e+00 : f32
    %13 = vector.broadcast %cst_6 : f32 to vector<8x32xf32>
    %cst_7 = arith.constant 1.000000e+00 : f32
    %14 = vector.broadcast %cst_7 : f32 to vector<8x32xf32>
    %cst_8 = arith.constant 1.000000e+00 : f32
    %15 = vector.broadcast %cst_8 : f32 to vector<8x32xf32>
    %16 = arith.mulf %12, %11 : vector<8x32xf32>
    %17 = arith.mulf %13, %5 : vector<8x32xf32>
    %18 = arith.addf %16, %17 : vector<8x32xf32>
    %19 = arith.mulf %13, %11 : vector<8x32xf32>
    %20 = arith.mulf %14, %5 : vector<8x32xf32>
    %21 = arith.addf %19, %20 : vector<8x32xf32>
    %22 = arith.mulf %14, %11 : vector<8x32xf32>
    %23 = arith.mulf %15, %5 : vector<8x32xf32>
    %24 = arith.addf %22, %23 : vector<8x32xf32>
    %25 = arith.mulf %18, %11 : vector<8x32xf32>
    %26 = arith.mulf %21, %5 : vector<8x32xf32>
    %27 = arith.addf %25, %26 : vector<8x32xf32>
    %28 = arith.mulf %21, %11 : vector<8x32xf32>
    %29 = arith.mulf %24, %5 : vector<8x32xf32>
    %30 = arith.addf %28, %29 : vector<8x32xf32>
    %31 = arith.mulf %27, %11 : vector<8x32xf32>
    %32 = arith.mulf %30, %5 : vector<8x32xf32>
    %33 = arith.addf %31, %32 : vector<8x32xf32>
    %34 = tpu.concatenate %33, %30, %24, %15 in 1 : vector<8x32xf32>, vector<8x32xf32>, vector<8x32xf32>, vector<8x32xf32> -> vector<8x128xf32>
    %35 = arith.truncf %34 : vector<8x128xf32> to vector<8x128xbf16>
    %c0_9 = arith.constant 0 : index
    %c0_10 = arith.constant 0 : index
    %36 = vector.load %arg3[%c0_9, %c0_10] : memref<128x32xbf16, #tpu.memory_space<vmem>>, vector<128x32xbf16>
    %cst_11 = arith.constant dense<0.000000e+00> : vector<8x32xf32>
    %37 = tpu.matmul %35, %36, %cst_11 {dimension_numbers = #tpu.dot_dimension_numbers<[1], [0], [0], [1], [0, 0, 1, 1], [], []>} : vector<8x128xbf16>, vector<128x32xbf16>, vector<8x32xf32> -> vector<8x32xf32>
    %38 = arith.addf %37, %9 : vector<8x32xf32>
    %cst_12 = arith.constant dense<0.000000e+00> : vector<8xf32>
    %39 = vector.multi_reduction <add>, %38, %cst_12 [1] : vector<8x32xf32> to vector<8xf32>
    %40 = vector.shape_cast %39 : vector<8xf32> to vector<8x1xf32>
    %cst_13 = arith.constant 3.200000e+01 : f32
    %41 = vector.broadcast %cst_13 : f32 to vector<8x1xf32>
    %42 = arith.divf %40, %41 : vector<8x1xf32>
    %43 = vector.broadcast %42 : vector<8x1xf32> to vector<8x32xf32>
    %44 = arith.subf %38, %43 : vector<8x32xf32>
    %45 = arith.mulf %44, %44 : vector<8x32xf32>
    %cst_14 = arith.constant dense<0.000000e+00> : vector<8xf32>
    %46 = vector.multi_reduction <add>, %45, %cst_14 [1] : vector<8x32xf32> to vector<8xf32>
    %47 = vector.shape_cast %46 : vector<8xf32> to vector<8x1xf32>
    %cst_15 = arith.constant 3.200000e+01 : f32
    %48 = vector.broadcast %cst_15 : f32 to vector<8x1xf32>
    %49 = arith.divf %47, %48 : vector<8x1xf32>
    %50 = vector.broadcast %42 : vector<8x1xf32> to vector<8x32xf32>
    %51 = arith.subf %38, %50 : vector<8x32xf32>
    %cst_16 = arith.constant 9.99999974E-6 : f32
    %52 = vector.broadcast %cst_16 : f32 to vector<8x1xf32>
    %53 = arith.addf %49, %52 : vector<8x1xf32>
    %54 = math.rsqrt %53 : vector<8x1xf32>
    %55 = vector.broadcast %54 : vector<8x1xf32> to vector<8x32xf32>
    %56 = arith.mulf %51, %55 : vector<8x32xf32>
    %c0_17 = arith.constant 0 : index
    %c0_18 = arith.constant 0 : index
    %57 = vector.load %arg4[%c0_17, %c0_18] : memref<1x32xf32, #tpu.memory_space<vmem>>, vector<1x32xf32>
    %58 = vector.broadcast %57 : vector<1x32xf32> to vector<8x32xf32>
    %59 = arith.mulf %56, %58 : vector<8x32xf32>
    %c0_19 = arith.constant 0 : index
    %c0_20 = arith.constant 0 : index
    %60 = vector.load %arg5[%c0_19, %c0_20] : memref<1x32xf32, #tpu.memory_space<vmem>>, vector<1x32xf32>
    %61 = vector.broadcast %60 : vector<1x32xf32> to vector<8x32xf32>
    %62 = arith.addf %59, %61 : vector<8x32xf32>
    %63 = arith.negf %62 : vector<8x32xf32>
    %64 = math.exp %63 : vector<8x32xf32>
    %cst_21 = arith.constant 1.000000e+00 : f32
    %65 = vector.broadcast %cst_21 : f32 to vector<8x32xf32>
    %66 = arith.addf %65, %64 : vector<8x32xf32>
    %67 = arith.divf %65, %66 : vector<8x32xf32>
    %68 = arith.mulf %62, %67 : vector<8x32xf32>
    %c0_22 = arith.constant 0 : index
    %c0_23 = arith.constant 0 : index
    %69 = vector.load %arg6[%c0_22, %c0_23] : memref<8x32xf32, #tpu.memory_space<vmem>>, vector<8x32xf32>
    tpu.vector_store %arg6[%c0_22, %c0_23], %68 {strides = array<i32>} : memref<8x32xf32, #tpu.memory_space<vmem>>, vector<8x32xf32>,
    return
  }
  func.func @transform_0(%arg0: i32) -> (i32, i32) {
    %c0_i32 = arith.constant 0 : i32
    %c0_i32_0 = arith.constant 0 : i32
    return %arg0, %c0_i32 : i32, i32
  }
  func.func @transform_1(%arg0: i32) -> (i32, i32) {
    %c0_i32 = arith.constant 0 : i32
    %c0_i32_0 = arith.constant 0 : i32
    %c0_i32_1 = arith.constant 0 : i32
    return %c0_i32, %c0_i32_0 : i32, i32
  }
  func.func @transform_2(%arg0: i32) -> (i32, i32) {
    %c0_i32 = arith.constant 0 : i32
    %c0_i32_0 = arith.constant 0 : i32
    %c0_i32_1 = arith.constant 0 : i32
    return %c0_i32, %c0_i32_0 : i32, i32
  }
  func.func @transform_3(%arg0: i32) -> (i32, i32) {
    %c0_i32 = arith.constant 0 : i32
    %c0_i32_0 = arith.constant 0 : i32
    %c0_i32_1 = arith.constant 0 : i32
    return %c0_i32, %c0_i32_0 : i32, i32
  }
  func.func @transform_4(%arg0: i32) -> (i32, i32) {
    %c0_i32 = arith.constant 0 : i32
    %c0_i32_0 = arith.constant 0 : i32
    %c0_i32_1 = arith.constant 0 : i32
    return %c0_i32, %c0_i32_0 : i32, i32
  }
  func.func @transform_5(%arg0: i32) -> (i32, i32) {
    %c0_i32 = arith.constant 0 : i32
    %c0_i32_0 = arith.constant 0 : i32
    return %arg0, %c0_i32 : i32, i32
  }
}

</mosaic_0001>

<llo_original>
// kernel: bernstein_kan_layer.1
$region0: #{bernstein_kan_layer.1}
  #allocation0 [shape = 'u32[]', space=smem, size = 0x4, offset = 0x4, fixed_abs, tag = 'smem constant byte address 0x4 - core index']
  #allocation1 [shape = 'u32[144,128]{1,0:T(1,128)}', space=vmem, size = 0x12000, scoped, tag = 'internal scratch']
  %s0 = inlined_call_operand.vmem [shape: f32[24,32], index: 0, kind: input, shape index: {}]
  %s1 = inlined_call_operand.vmem [shape: bf16[32,32], index: 1, kind: input, shape index: {}]
  %s2 = inlined_call_operand.vmem [shape: bf16[128,32], index: 2, kind: input, shape index: {}]
  %s3 = inlined_call_operand.vmem [shape: f32[1,32], index: 3, kind: input, shape index: {}]
  %s4 = inlined_call_operand.vmem [shape: f32[1,32], index: 4, kind: input, shape index: {}]
  %s5 = inlined_call_operand.hbm [shape: f32[24,32], index: 5, kind: output, shape index: {}]
  %s6 = sld [smem:[#allocation0]]
  $region53: #{bernstein_kan_layer.1} parent=0
    _
  %s8 = ssub.s32 1, %s6
  %s9 = scalar_select 0, %s8, %s6
  $region1: #{bernstein_kan_layer.1} parent=0
    #allocation2 [shape = 'u8[8192]{0}', space=vmem, size = 0x2000, scoped, tag = 'output window, operand 0']
    #allocation3 [shape = 's32[2]{0}', space=sflag, size = 0x8, scoped, tag = 'scoped memory for bernstein_kan_layer.1']
    %10 = vsyncpa [#allocation3], 0
    %s11 = scalar_lea.sflag [#allocation3], 1
    %12 = vsyncpa %s11, 0
    loop: start=0, step=1, limit=5
    $region2: #{bernstein_kan_layer.1} parent=1 // loop_pre_header
      _
    $region3: #{bernstein_kan_layer.1} parent=1 // loop_header
      %s14 = sphi 0, %s18
      %p15 = scmp.ge.s32.totalorder %s14, 5
      %s24 = sphi 0, %s26
      %s27 = sphi 0, %s24
      %s28 = sphi 0, %s27
      %s44 = sphi 0, %s28
      %s48 = sphi 0, %s48
      %s50 = sphi 0, %s48
      %s51 = sphi 0, %s50
      %s65 = sphi 0, %s51
      %s69 = sphi 0, %s69
      %s71 = sphi 0, %s69
      %s72 = sphi 0, %s71
      %s86 = sphi 0, %s72
      %s90 = sphi 0, %s90
      %s92 = sphi 0, %s90
      %s93 = sphi 0, %s92
      %s107 = sphi 0, %s93
      %s111 = sphi 0, %s111
      %s113 = sphi 0, %s111
      %s114 = sphi 0, %s113
      %s128 = sphi 0, %s114
      %s134 = sphi 0, %s136
      %s137 = sphi 0, %s134
      %s138 = sphi 0, %s137
      %s154 = sphi 0, %s138
    $region4: #{bernstein_kan_layer.1} parent=1 // loop_header_branch
      %17 = sbr.rel (%p15) target = $region8
    $region5: #{bernstein_kan_layer.1} parent=1 // loop_body
      %s19 = ssub.s32 %s14, 1
      %s20 = ssub.s32 %s14, 2
      %s21 = sadd.s32 %s14, 1
      %s22 = ssub.s32 %s14, %s21
      %p23 = scmp.eq.s32.totalorder %s22, 0
      %s25 = sadd.s32 %s24, 1
      %s26 = scalar_select %p23, %s24, %s25
      %p29 = pneg %p23
      %p30 = scmp.eq.s32.totalorder %s14, 2
      %p31 = por %p29, %p30
      %p32 = scmp.ne.s32.totalorder %s24, %s27
      %p33 = scmp.eq.s32.totalorder %s14, 0
      %p34 = por %p32, %p33
      %p35 = scmp.ne.s32.totalorder %s24, %s27
      %p36 = scmp.eq.s32.totalorder %s19, 2
      %p37 = por %p35, %p36
      %p38 = scmp.ne.s32.totalorder %s27, %s28
      %p39 = scmp.eq.s32.totalorder %s19, 0
      %p40 = por %p38, %p39
      %p41 = scmp.ne.s32.totalorder %s27, %s28
      %p42 = scmp.eq.s32.totalorder %s20, 2
      %p43 = por %p41, %p42
      %p45 = scmp.ne.s32.totalorder %s28, %s44
      %p46 = scmp.eq.s32.totalorder %s20, 0
      %p47 = por %p45, %p46
      %s49 = sadd.s32 %s48, 1
      %p52 = scmp.eq.s32.totalorder %s14, 2
      %p53 = scmp.ne.s32.totalorder %s48, %s50
      %p54 = scmp.eq.s32.totalorder %s14, 0
      %p55 = por %p53, %p54
      %p56 = scmp.ne.s32.totalorder %s48, %s50
      %p57 = scmp.eq.s32.totalorder %s19, 2
      %p58 = por %p56, %p57
      %p59 = scmp.ne.s32.totalorder %s50, %s51
      %p60 = scmp.eq.s32.totalorder %s19, 0
      %p61 = por %p59, %p60
      %p62 = scmp.ne.s32.totalorder %s50, %s51
      %p63 = scmp.eq.s32.totalorder %s20, 2
      %p64 = por %p62, %p63
      %p66 = scmp.ne.s32.totalorder %s51, %s65
      %p67 = scmp.eq.s32.totalorder %s20, 0
      %p68 = por %p66, %p67
      %s70 = sadd.s32 %s69, 1
      %p73 = scmp.eq.s32.totalorder %s14, 2
      %p74 = scmp.ne.s32.totalorder %s69, %s71
      %p75 = scmp.eq.s32.totalorder %s14, 0
      %p76 = por %p74, %p75
      %p77 = scmp.ne.s32.totalorder %s69, %s71
      %p78 = scmp.eq.s32.totalorder %s19, 2
      %p79 = por %p77, %p78
      %p80 = scmp.ne.s32.totalorder %s71, %s72
      %p81 = scmp.eq.s32.totalorder %s19, 0
      %p82 = por %p80, %p81
      %p83 = scmp.ne.s32.totalorder %s71, %s72
      %p84 = scmp.eq.s32.totalorder %s20, 2
      %p85 = por %p83, %p84
      %p87 = scmp.ne.s32.totalorder %s72, %s86
      %p88 = scmp.eq.s32.totalorder %s20, 0
      %p89 = por %p87, %p88
      %s91 = sadd.s32 %s90, 1
      %p94 = scmp.eq.s32.totalorder %s14, 2
      %p95 = scmp.ne.s32.totalorder %s90, %s92
      %p96 = scmp.eq.s32.totalorder %s14, 0
      %p97 = por %p95, %p96
      %p98 = scmp.ne.s32.totalorder %s90, %s92
      %p99 = scmp.eq.s32.totalorder %s19, 2
      %p100 = por %p98, %p99
      %p101 = scmp.ne.s32.totalorder %s92, %s93
      %p102 = scmp.eq.s32.totalorder %s19, 0
      %p103 = por %p101, %p102
      %p104 = scmp.ne.s32.totalorder %s92, %s93
      %p105 = scmp.eq.s32.totalorder %s20, 2
      %p106 = por %p104, %p105
      %p108 = scmp.ne.s32.totalorder %s93, %s107
      %p109 = scmp.eq.s32.totalorder %s20, 0
      %p110 = por %p108, %p109
      %s112 = sadd.s32 %s111, 1
      %p115 = scmp.eq.s32.totalorder %s14, 2
      %p116 = scmp.ne.s32.totalorder %s111, %s113
      %p117 = scmp.eq.s32.totalorder %s14, 0
      %p118 = por %p116, %p117
      %p119 = scmp.ne.s32.totalorder %s111, %s113
      %p120 = scmp.eq.s32.totalorder %s19, 2
      %p121 = por %p119, %p120
      %p122 = scmp.ne.s32.totalorder %s113, %s114
      %p123 = scmp.eq.s32.totalorder %s19, 0
      %p124 = por %p122, %p123
      %p125 = scmp.ne.s32.totalorder %s113, %s114
      %p126 = scmp.eq.s32.totalorder %s20, 2
      %p127 = por %p125, %p126
      %p129 = scmp.ne.s32.totalorder %s114, %s128
      %p130 = scmp.eq.s32.totalorder %s20, 0
      %p131 = por %p129, %p130
      %s132 = ssub.s32 %s14, %s21
      %p133 = scmp.eq.s32.totalorder %s132, 0
      %s135 = sadd.s32 %s134, 1
      %s136 = scalar_select %p133, %s134, %s135
      %p139 = pneg %p133
      %p140 = scmp.eq.s32.totalorder %s14, 2
      %p141 = por %p139, %p140
      %p142 = scmp.ne.s32.totalorder %s134, %s137
      %p143 = scmp.eq.s32.totalorder %s14, 0
      %p144 = por %p142, %p143
      %p145 = scmp.ne.s32.totalorder %s134, %s137
      %p146 = scmp.eq.s32.totalorder %s19, 2
      %p147 = por %p145, %p146
      %p148 = scmp.ne.s32.totalorder %s137, %s138
      %p149 = scmp.eq.s32.totalorder %s19, 0
      %p150 = por %p148, %p149
      %p151 = scmp.ne.s32.totalorder %s137, %s138
      %p152 = scmp.eq.s32.totalorder %s20, 2
      %p153 = por %p151, %p152
      %p155 = scmp.ne.s32.totalorder %s138, %s154
      %p156 = scmp.eq.s32.totalorder %s20, 0
      %p157 = por %p155, %p156
      %p158 = scmp.le.s32.totalorder 1, %s14
      %p159 = scmp.lt.s32.totalorder %s14, 4
      %p160 = pnand %p158, %p159
      %p161 = pneg %p160
      // Predicated region
      $region9: #{bernstein_kan_layer.1} parent=5 // pred_check
        _
      $region10: #{bernstein_kan_layer.1} parent=5 // pred_check_branch
        %163 = sbr.rel (%p160) target = $region12
      $region11: #{bernstein_kan_layer.1} parent=5 // pred_region
        %s164 = ssub.s32 %s14, 1
        // Predicated region
        $region13: #{bernstein_kan_layer.1} parent=11 // pred_check
          %p165 = pneg %p61
        $region14: #{bernstein_kan_layer.1} parent=11 // pred_check_branch
          %167 = sbr.rel (%p165) target = $region16
        $region15: #{bernstein_kan_layer.1} parent=11 // pred_region
          _
        $region16: #{bernstein_kan_layer.1} parent=11 // pred_fallthru
          _
        // Predicated region
        $region17: #{bernstein_kan_layer.1} parent=11 // pred_check
          %p168 = pneg %p82
        $region18: #{bernstein_kan_layer.1} parent=11 // pred_check_branch
          %170 = sbr.rel (%p168) target = $region20
        $region19: #{bernstein_kan_layer.1} parent=11 // pred_region
          _
        $region20: #{bernstein_kan_layer.1} parent=11 // pred_fallthru
          _
        // Predicated region
        $region21: #{bernstein_kan_layer.1} parent=11 // pred_check
          %p171 = pneg %p103
        $region22: #{bernstein_kan_layer.1} parent=11 // pred_check_branch
          %173 = sbr.rel (%p171) target = $region24
        $region23: #{bernstein_kan_layer.1} parent=11 // pred_region
          _
        $region24: #{bernstein_kan_layer.1} parent=11 // pred_fallthru
          _
        // Predicated region
        $region25: #{bernstein_kan_layer.1} parent=11 // pred_check
          %p174 = pneg %p124
        $region26: #{bernstein_kan_layer.1} parent=11 // pred_check_branch
          %176 = sbr.rel (%p174) target = $region28
        $region27: #{bernstein_kan_layer.1} parent=11 // pred_region
          _
        $region28: #{bernstein_kan_layer.1} parent=11 // pred_fallthru
          _
      $region12: #{bernstein_kan_layer.1} parent=5 // pred_fallthru
        _
      %p177 = scmp.lt.s32.totalorder %s14, 3
      // Predicated region
      $region29: #{bernstein_kan_layer.1} parent=5 // pred_check
        %p178 = pneg %p177
      $region30: #{bernstein_kan_layer.1} parent=5 // pred_check_branch
        %180 = sbr.rel (%p178) target = $region32
      $region31: #{bernstein_kan_layer.1} parent=5 // pred_region
        // Predicated region
        $region33: #{bernstein_kan_layer.1} parent=31 // pred_check
          %p181 = pneg %p34
        $region34: #{bernstein_kan_layer.1} parent=31 // pred_check_branch
          %183 = sbr.rel (%p181) target = $region36
        $region35: #{bernstein_kan_layer.1} parent=31 // pred_region
          %p184 = scmp.lt.s32.totalorder %s14, 2
          %s185 = scalar_select %p184, %s14, 2
          %s186 = smul.addr %s185, 8
          %s187 = scalar_lea.vmem %s0, %s186
        $region36: #{bernstein_kan_layer.1} parent=31 // pred_fallthru
          _
      $region32: #{bernstein_kan_layer.1} parent=5 // pred_fallthru
        _
      %p188 = scmp.le.s32.totalorder 1, %s14
      %p189 = scmp.lt.s32.totalorder %s14, 4
      %p190 = pnand %p188, %p189
      %p191 = pneg %p190
      // Predicated region
      $region37: #{bernstein_kan_layer.1} parent=5 // pred_check
        _
      $region38: #{bernstein_kan_layer.1} parent=5 // pred_check_branch
        %193 = sbr.rel (%p190) target = $region40
      $region39: #{bernstein_kan_layer.1} parent=5 // pred_region
        %s194 = ssub.s32 %s14, 1
        %p195 = scmp.lt.s32.totalorder %s19, 2
        %s196 = scalar_select %p195, %s19, 2
        %s197 = smul.addr %s196, 8
        %s198 = scalar_lea.vmem %s0, %s197
        %p199 = pneg %p40
        %p200 = pneg %p37
        %p201 = pneg %p61
        %p202 = pneg %p58
        %p203 = pneg %p82
        %p204 = pneg %p79
        %p205 = pneg %p103
        %p206 = pneg %p100
        %p207 = pneg %p124
        %p208 = pneg %p121
        %p209 = pneg %p150
        %p210 = pneg %p147
        %s211 = sand.u32 %s137, 1
        %s212 = scalar_lea.sflag [#allocation3], %s211
        %s213 = sand.u32 %s137, 1
        %s214 = smul.addr %s213, 8
        %s215 = scalar_lea.vmem [#allocation2], %s214
        %p216 = scmp.lt.s32.totalorder %s19, 2
        %s217 = scalar_select %p216, %s19, 2
        %s218 = smul.addr %s217, 8
        %s219 = scalar_lea.vmem %s0, %s218
        %v221 = vld [vmem:[%s219] sm:$0xff]
        %v222 = vxor.u32 %v221, 2147483648
        %v223 = vmul.f32 %v222, 1.442695
        %v224 = vpow.pop %v223
        %v225 = vadd.f32 %v224, 1.0
        %v226 = vrcp.pop %v225
        %v227 = vmul.f32 1.0, %v226
        %v228 = vmul.f32 %v221, %v227
        %v229 = vpack.c.bf16 %v228, %v228
        %v230 = vld [vmem:[%s1] sm:$0xf]
        %v231 = vld [vmem:[%s1 + $0x4] sm:$0xf]
        %v232 = vld [vmem:[%s1 + $0x8] sm:$0xf]
        %v233 = vld [vmem:[%s1 + $0xc] sm:$0xf]
        %v238 = vunpack.c.l.b16 %v230
        %v239 = vunpack.c.l.b16 %v231
        %v240 = vunpack.c.l.b16 %v232
        %v241 = vunpack.c.l.b16 %v233
        %v242 = vpack.c.b16 %v239, %v238
        %v243 = vpack.c.b16 %v241, %v240
        %vm246 = vcmask 261120
        %v248 = vsel %vm246, %v229, 0
        %250 = vmatprep.subr.bf16.mxu0 0
        %251 = vmatpush1.bf16.msra.mxu0 %v242
        %252 = vmatprep.subr.bf16.mxu0 0
        %253 = vmatpush1.bf16.msra.mxu0 %v243
        %254 = vmatprep.subr.bf16.mxu0 0
        %255 = vmatpush1.bf16.msra.mxu0 0
        %256 = vmatprep.subr.bf16.mxu0 0
        %257 = vmatpush1.bf16.msra.mxu0 0
        %258 = vmatprep.subr.bf16.mxu0 0
        %259 = vmatpush1.bf16.msra.mxu0 0
        %260 = vmatprep.subr.bf16.mxu0 0
        %261 = vmatpush1.bf16.msra.mxu0 0
        %262 = vmatprep.subr.bf16.mxu0 0
        %263 = vmatpush1.bf16.msra.mxu0 0
        %264 = vmatprep.subr.bf16.mxu0 0
        %265 = vmatpush1.bf16.msra.mxu0 0
        %266 = vmatprep.subr.bf16.mxu0 0
        %267 = vmatpush1.bf16.msra.mxu0 0
        %268 = vmatprep.subr.bf16.mxu0 0
        %269 = vmatpush1.bf16.msra.mxu0 0
        %270 = vmatprep.subr.bf16.mxu0 0
        %271 = vmatpush1.bf16.msra.mxu0 0
        %272 = vmatprep.subr.bf16.mxu0 0
        %273 = vmatpush1.bf16.msra.mxu0 0
        %274 = vmatprep.subr.bf16.mxu0 0
        %275 = vmatpush1.bf16.msra.mxu0 0
        %276 = vmatprep.subr.bf16.mxu0 0
        %277 = vmatpush1.bf16.msra.mxu0 0
        %278 = vmatprep.subr.bf16.mxu0 0
        %279 = vmatpush1.bf16.msra.mxu0 0
        %280 = vmatprep.subr.bf16.mxu0 0
        %281 = vmatpush1.bf16.msra.mxu0 0
        %282 = vmatprep.mubr.bf16.mxu0 0
        %283 = vmatmul.mubr.bf16.gmra.mrb[0].mxu0 %v248
        %v284 = vpop.f32.mrb[0].mxu0
        %v285 = vadd.f32 0.0, %v284
        %v286 = vpop.f32.mrb[0].mxu0
        %v287 = vpop.f32.mrb[0].mxu0
        %v288 = vpop.f32.mrb[0].mxu0
        %289 = vdwg.mxu0
        %v290 = vsub.f32 1.0, %v227
        %v291 = vadd.f32 %v290, %v227
        %v292 = vmul.f32 %v291, %v290
        %v293 = vmul.f32 %v291, %v227
        %v294 = vadd.f32 %v292, %v293
        %v295 = vmul.f32 %v294, %v290
        %v296 = vmul.f32 %v294, %v227
        %v297 = vadd.f32 %v295, %v296
        %299 = vrot.lane.b32.xlu0 %v294, 32
        %v300 = vpop.permute.xlu0 %299
        %303 = vrot.lane.b32.xlu0 %v291, 64
        %v304 = vpop.permute.xlu0 %303
        %v306 = vsel %vm246, %v297, %v300
        %vm307 = vcmask 523264
        %v308 = vsel %vm307, %v306, %v304
        %vm309 = vcmask 785408
        %v310 = vsel %vm309, %v308, 1.0
        %v311 = vpack.c.bf16 %v310, %v310
        %v312 = vld [vmem:[%s2] sm:$0xf]
        %v313 = vld [vmem:[%s2 + $0x4] sm:$0xf]
        %v314 = vld [vmem:[%s2 + $0x8] sm:$0xf]
        %v315 = vld [vmem:[%s2 + $0xc] sm:$0xf]
        %v316 = vld [vmem:[%s2 + $0x10] sm:$0xf]
        %v317 = vld [vmem:[%s2 + $0x14] sm:$0xf]
        %v318 = vld [vmem:[%s2 + $0x18] sm:$0xf]
        %v319 = vld [vmem:[%s2 + $0x1c] sm:$0xf]
        %v320 = vld [vmem:[%s2 + $0x20] sm:$0xf]
        %v321 = vld [vmem:[%s2 + $0x24] sm:$0xf]
        %v322 = vld [vmem:[%s2 + $0x28] sm:$0xf]
        %v323 = vld [vmem:[%s2 + $0x2c] sm:$0xf]
        %v324 = vld [vmem:[%s2 + $0x30] sm:$0xf]
        %v325 = vld [vmem:[%s2 + $0x34] sm:$0xf]
        %v326 = vld [vmem:[%s2 + $0x38] sm:$0xf]
        %v327 = vld [vmem:[%s2 + $0x3c] sm:$0xf]
        %v344 = vunpack.c.l.b16 %v312
        %v345 = vunpack.c.l.b16 %v313
        %v346 = vunpack.c.l.b16 %v314
        %v347 = vunpack.c.l.b16 %v315
        %v348 = vunpack.c.l.b16 %v316
        %v349 = vunpack.c.l.b16 %v317
        %v350 = vunpack.c.l.b16 %v318
        %v351 = vunpack.c.l.b16 %v319
        %v352 = vunpack.c.l.b16 %v320
        %v353 = vunpack.c.l.b16 %v321
        %v354 = vunpack.c.l.b16 %v322
        %v355 = vunpack.c.l.b16 %v323
        %v356 = vunpack.c.l.b16 %v324
        %v357 = vunpack.c.l.b16 %v325
        %v358 = vunpack.c.l.b16 %v326
        %v359 = vunpack.c.l.b16 %v327
        %v360 = vpack.c.b16 %v345, %v344
        %v361 = vpack.c.b16 %v347, %v346
        %v362 = vpack.c.b16 %v349, %v348
        %v363 = vpack.c.b16 %v351, %v350
        %v364 = vpack.c.b16 %v353, %v352
        %v365 = vpack.c.b16 %v355, %v354
        %v366 = vpack.c.b16 %v357, %v356
        %v367 = vpack.c.b16 %v359, %v358
        %376 = vmatprep.subr.bf16.mxu0 0
        %377 = vmatpush1.bf16.msra.mxu0 %v360
        %378 = vmatprep.subr.bf16.mxu0 0
        %379 = vmatpush1.bf16.msra.mxu0 %v361
        %380 = vmatprep.subr.bf16.mxu0 0
        %381 = vmatpush1.bf16.msra.mxu0 %v362
        %382 = vmatprep.subr.bf16.mxu0 0
        %383 = vmatpush1.bf16.msra.mxu0 %v363
        %384 = vmatprep.subr.bf16.mxu0 0
        %385 = vmatpush1.bf16.msra.mxu0 %v364
        %386 = vmatprep.subr.bf16.mxu0 0
        %387 = vmatpush1.bf16.msra.mxu0 %v365
        %388 = vmatprep.subr.bf16.mxu0 0
        %389 = vmatpush1.bf16.msra.mxu0 %v366
        %390 = vmatprep.subr.bf16.mxu0 0
        %391 = vmatpush1.bf16.msra.mxu0 %v367
        %392 = vmatprep.subr.bf16.mxu0 0
        %393 = vmatpush1.bf16.msra.mxu0 0
        %394 = vmatprep.subr.bf16.mxu0 0
        %395 = vmatpush1.bf16.msra.mxu0 0
        %396 = vmatprep.subr.bf16.mxu0 0
        %397 = vmatpush1.bf16.msra.mxu0 0
        %398 = vmatprep.subr.bf16.mxu0 0
        %399 = vmatpush1.bf16.msra.mxu0 0
        %400 = vmatprep.subr.bf16.mxu0 0
        %401 = vmatpush1.bf16.msra.mxu0 0
        %402 = vmatprep.subr.bf16.mxu0 0
        %403 = vmatpush1.bf16.msra.mxu0 0
        %404 = vmatprep.subr.bf16.mxu0 0
        %405 = vmatpush1.bf16.msra.mxu0 0
        %406 = vmatprep.subr.bf16.mxu0 0
        %407 = vmatpush1.bf16.msra.mxu0 0
        %408 = vmatprep.mubr.bf16.mxu0 0
        %409 = vmatmul.mubr.bf16.gmra.mrb[0].mxu0 %v311
        %v410 = vpop.f32.mrb[0].mxu0
        %v411 = vadd.f32 %v285, %v410
        %v412 = vpop.f32.mrb[0].mxu0
        %v413 = vpop.f32.mrb[0].mxu0
        %v414 = vpop.f32.mrb[0].mxu0
        %415 = vdwg.mxu0
        %v416 = vsel %vm246, %v411, 0.0
        %417 = vadd.xlane.f32.xlu0 %v416
        %v418 = vpop.xlane.xlu0 %417
        %v419 = vrcp.pop 32.0
        %v420 = vmul.f32 %v418, %v419
        %v421 = vsub.f32 %v411, %v420
        %v422 = vmul.f32 %v421, %v421
        %v423 = vsel %vm246, %v422, 0.0
        %424 = vadd.xlane.f32.xlu0 %v423
        %v425 = vpop.xlane.xlu0 %424
        %v426 = vmul.f32 %v425, %v419
        %v427 = vadd.f32 %v426, 1e-05
        %v428 = vrsqrt.pop %v427
        %v429 = vmul.f32 %v421, %v428
        %v430 = vld [vmem:[%s3] sm:$0x1]
        %v432 = vlaneseq
        %v433 = vshrl.u32 %v432, 7
        %v434 = vsub.s32 0, %v433
        %v435 = vrot.slane %v430, %v434
        %v437 = vmul.f32 %v429, %v435
        %v438 = vld [vmem:[%s4] sm:$0x1]
        %v440 = vlaneseq
        %v441 = vshrl.u32 %v440, 7
        %v442 = vsub.s32 0, %v441
        %v443 = vrot.slane %v438, %v442
        %v445 = vadd.f32 %v437, %v443
        %v446 = vxor.u32 %v445, 2147483648
        %v447 = vmul.f32 %v446, 1.442695
        %v448 = vpow.pop %v447
        %v449 = vadd.f32 %v448, 1.0
        %v450 = vrcp.pop %v449
        %v451 = vmul.f32 1.0, %v450
        %v452 = vmul.f32 %v445, %v451
        %453 = vst.msk [vmem:[%s215] sm:$0xff] %vm246, %v452
        %s454 = sand.u32 %s137, 1
        %s455 = scalar_lea.sflag [#allocation3], %s454
        %s456 = sand.u32 %s137, 1
        %s457 = smul.addr %s456, 8
        %s458 = scalar_lea.vmem [#allocation2], %s457
        // Predicated region
        $region41: #{bernstein_kan_layer.1} parent=39 // pred_check
          %p459 = pneg %p147
        $region42: #{bernstein_kan_layer.1} parent=39 // pred_check_branch
          %461 = sbr.rel (%p459) target = $region44
        $region43: #{bernstein_kan_layer.1} parent=39 // pred_region
          %s463 = ssub.s32 128, 128
          %464 = vsyncadd %s455, %s463
          %s465 = smul.addr %s19, 128
          %s466 = scalar_lea.hbm %s5, %s465
          %s468 = sshll.u32 %s458, 4
          %s469 = int_to_ptr.vmem [resolvable:$true] %s468
          %471 = dma.vmem_to_hbm [thread:$0]  %s469, 128, %s466, %s455
        $region44: #{bernstein_kan_layer.1} parent=39 // pred_fallthru
          _
      $region40: #{bernstein_kan_layer.1} parent=5 // pred_fallthru
        _
      %p472 = scmp.le.s32.totalorder 2, %s14
      // Predicated region
      $region45: #{bernstein_kan_layer.1} parent=5 // pred_check
        %p473 = pneg %p472
      $region46: #{bernstein_kan_layer.1} parent=5 // pred_check_branch
        %475 = sbr.rel (%p473) target = $region48
      $region47: #{bernstein_kan_layer.1} parent=5 // pred_region
        %s476 = ssub.s32 %s14, 2
        // Predicated region
        $region49: #{bernstein_kan_layer.1} parent=47 // pred_check
          %p477 = pneg %p153
        $region50: #{bernstein_kan_layer.1} parent=47 // pred_check_branch
          %479 = sbr.rel (%p477) target = $region52
        $region51: #{bernstein_kan_layer.1} parent=47 // pred_region
          %s480 = sand.u32 %s138, 1
          %s481 = scalar_lea.sflag [#allocation3], %s480
          %s482 = sand.u32 %s138, 1
          %s483 = smul.addr %s482, 8
          %s484 = scalar_lea.vmem [#allocation2], %s483
          %485 = dma.done %s481, 128
        $region52: #{bernstein_kan_layer.1} parent=47 // pred_fallthru
          _
      $region48: #{bernstein_kan_layer.1} parent=5 // pred_fallthru
        _
    $region6: #{bernstein_kan_layer.1} parent=1 // loop_footer
      %s18 = sadd.s32 1, %s14
    $region7: #{bernstein_kan_layer.1} parent=1 // loop_footer_branch
      %13 = sbr.rel target = $region3
    $region8: #{bernstein_kan_layer.1} parent=1 // loop_exit
      _
    %486 = vsyncpa [#allocation3], 1
    %s487 = scalar_lea.sflag [#allocation3], 1
    %488 = vsyncpa %s487, 1

</llo_original>
